<compile_context>
chip_gen: v5e
topology: v5e:2x2
jax: 0.10.0
libtpu: 0.0.40
codegen_flags: <defaults>
</compile_context>

<pallas_src>
import jax
import jax.numpy as jnp
from jax.experimental import pallas as pl
from jax.experimental.pallas import tpu as pltpu

# ----------------------------- problem sizes -----------------------------
B = 2            # batch
F = 4            # video frames
CIN_V = 4        # video in channels
COUT_V = 8       # video out channels (spatial out == temporal in/out)
H = 16           # video height
W = 16           # video width
CIN_A = 4        # audio in channels
COUT_A = 8       # audio out channels
T_A = 128        # audio length (lane-dense)
KSZ = 3          # conv kernel size, padding='same'


# ------------------------------- kernel ----------------------------------
def fused_kernel(vp_ref, wv_ref, ap_ref, wa_ref, vout_ref, aout_ref):
    """Fused video (precomposed 2d+1d conv) + audio (1d conv) forward.

    vp_ref : (Kv, B*F*H*W)  video im2col patches (taps + F frame-indicator rows)
    wv_ref : (Cv, Kv)       effective spatio-temporal weight + F bias columns
    ap_ref : (Ka, B*T)      audio im2col patches (taps + ones row, zero-padded)
    wa_ref : (Ca, Ka)       audio weight with bias column folded in
    vout_ref: (B, F, Cv, H*W)
    aout_ref: (B, Ca, T)
    """
    b, f, _, hw = vout_ref.shape
    nb, _, t = aout_ref.shape

    # Whole video path: one lane-dense MXU matmul (Cv, Kv) x (Kv, B*F*HW).
    v = jnp.dot(wv_ref[...], vp_ref[...],
                preferred_element_type=jnp.float32)          # (Cv, B*F*HW)
    # Reorder to (B, F, Cv, HW) with whole-vreg (256-lane-aligned) slices.
    for i in range(b * f):
        vout_ref[i // f, i % f] = v[:, i * hw:(i + 1) * hw].astype(vout_ref.dtype)

    # Audio path: one matmul (Ca, Ka) x (Ka, B*T).
    a = jnp.dot(wa_ref[...], ap_ref[...],
                preferred_element_type=jnp.float32)          # (Ca, B*T)
    for i in range(nb):
        aout_ref[i] = a[:, i * t:(i + 1) * t].astype(aout_ref.dtype)


# --------------------------- host-side prep -------------------------------
def _video_patches(video):
    """(B,F,Cin,H,W) -> (27*Cin + F, B*F*H*W) im2col with frame-indicator rows."""
    b, f, cin, h, w = video.shape
    n = b * f * h * w
    xt = jnp.transpose(video.astype(jnp.float32), (2, 0, 1, 3, 4))   # (cin,b,f,h,w)
    xp = jnp.pad(xt, ((0, 0), (0, 0), (1, 1), (1, 1), (1, 1)))       # zero pad f,h,w
    taps = []
    for kt in range(KSZ):
        for dy in range(KSZ):
            for dx in range(KSZ):
                taps.append(xp[:, :, kt:kt + f, dy:dy + h, dx:dx + w]
                            .reshape(cin, n))
    # Frame-indicator rows (per-frame effective-bias fold).
    frame_id = (jnp.arange(n) // (h * w)) % f
    ind = (frame_id[None, :] == jnp.arange(f)[:, None]).astype(jnp.float32)
    return jnp.concatenate(taps + [ind], axis=0)                      # (27*cin+f, n)


def _video_weight(w_s, b_s, w_t, b_t, f):
    """Precompose spatial+temporal conv weights + per-frame effective bias."""
    w_s = w_s.astype(jnp.float32)
    b_s = b_s.astype(jnp.float32)
    w_t = w_t.astype(jnp.float32)
    b_t = b_t.astype(jnp.float32)
    cv = w_t.shape[0]
    # W_eff[co, kt, dy, dx, ci] = sum_cm W_t[co,cm,kt] * W_s[cm,ci,dy,dx]
    w_eff = jnp.einsum('ock,ciyx->okyxi', w_t, w_s).reshape(cv, -1)   # (cv, 27*cin)
    # Per-frame bias: b_t + sum over temporally-valid taps of W_t[:,:,kt] @ b_s
    # (temporal 'same' padding pads the spatial OUTPUT with zeros, not b_s).
    bs_contrib = jnp.einsum('ock,c->ko', w_t, b_s)                    # (KSZ, cv)
    fr = jnp.arange(f)[:, None]
    kt = jnp.arange(KSZ)[None, :]
    fi = fr + kt - (KSZ // 2)
    valid = ((fi >= 0) & (fi < f)).astype(jnp.float32)                # (f, KSZ)
    b_eff = b_t[None, :] + valid @ bs_contrib                         # (f, cv)
    return jnp.concatenate([w_eff, b_eff.T], axis=1)                  # (cv, 27*cin+f)


def _audio_patches(audio):
    """(B,Cin,T) -> (ceil8(3*Cin+1), B*T) im2col with ones row (bias fold)."""
    b, cin, t = audio.shape
    n = b * t
    xt = jnp.transpose(audio.astype(jnp.float32), (1, 0, 2))          # (cin, b, t)
    xp = jnp.pad(xt, ((0, 0), (0, 0), (1, 1)))
    taps = [xp[:, :, k:k + t].reshape(cin, n) for k in range(KSZ)]
    taps.append(jnp.ones((1, n), jnp.float32))
    pad_rows = (-(KSZ * cin + 1)) % 8
    if pad_rows:
        taps.append(jnp.zeros((pad_rows, n), jnp.float32))
    return jnp.concatenate(taps, axis=0)                               # (16, b*t)


def _audio_weight(w_a, b_a):
    ca, cin, _ = w_a.shape
    wm = jnp.concatenate([w_a[:, :, k] for k in range(KSZ)] + [b_a[:, None]],
                         axis=1).astype(jnp.float32)                   # (ca, 3*cin+1)
    pad_cols = (-(KSZ * cin + 1)) % 8
    if pad_cols:
        wm = jnp.concatenate([wm, jnp.zeros((ca, pad_cols), jnp.float32)], axis=1)
    return wm                                                          # (ca, 16)


# ------------------------------- wrapper -----------------------------------
def initial_block(video, audio, w_s, b_s, w_t, b_t, w_a, b_a):
    b, f, _, h, w = video.shape
    hw = h * w
    cv = w_t.shape[0]
    _, _, t = audio.shape
    ca = w_a.shape[0]

    vpatch = _video_patches(video)                 # (112, B*F*HW = 2048)
    wv = _video_weight(w_s, b_s, w_t, b_t, f)      # (8, 112)
    apatch = _audio_patches(audio)                 # (16, B*T = 256)
    wa = _audio_weight(w_a, b_a)                   # (8, 16)

    vmem = pltpu.MemorySpace.VMEM
    v_out, a_out = pl.pallas_call(
        fused_kernel,
        out_shape=(
            jax.ShapeDtypeStruct((b, f, cv, hw), jnp.float32),
            jax.ShapeDtypeStruct((b, ca, t), jnp.float32),
        ),
        in_specs=[
            pl.BlockSpec(memory_space=vmem),   # vpatch
            pl.BlockSpec(memory_space=vmem),   # wv
            pl.BlockSpec(memory_space=vmem),   # apatch
            pl.BlockSpec(memory_space=vmem),   # wa
        ],
        out_specs=(
            pl.BlockSpec(memory_space=vmem),
            pl.BlockSpec(memory_space=vmem),
        ),
    )(vpatch, wv, apatch, wa)
    return v_out.reshape(b, f, cv, h, w), a_out


# -------------------- pure-JAX reference (for checking) --------------------
def reference(video, audio, w_s, b_s, w_t, b_t, w_a, b_a):
    b, f, cin, h, w = video.shape
    cmid = w_s.shape[0]
    cout = w_t.shape[0]
    v = video.reshape(b * f, cin, h, w).astype(jnp.float32)
    v = jax.lax.conv_general_dilated(
        v, w_s, window_strides=(1, 1), padding='SAME',
        dimension_numbers=('NCHW', 'OIHW', 'NCHW')) + b_s.reshape(1, -1, 1, 1)
    v = v.reshape(b, f, cmid, h, w)
    v = jnp.transpose(v, (0, 3, 4, 2, 1)).reshape(b * h * w, cmid, f)
    v = jax.lax.conv_general_dilated(
        v, w_t, window_strides=(1,), padding='SAME',
        dimension_numbers=('NCH', 'OIH', 'NCH')) + b_t.reshape(1, -1, 1)
    v = v.reshape(b, h, w, cout, f)
    v = jnp.transpose(v, (0, 4, 3, 1, 2))

    a = jax.lax.conv_general_dilated(
        audio.astype(jnp.float32), w_a, window_strides=(1,), padding='SAME',
        dimension_numbers=('NCH', 'OIH', 'NCH')) + b_a.reshape(1, -1, 1)
    return v, a


if __name__ == "__main__":
    key = jax.random.PRNGKey(0)
    kv, ka, k1, k2, k3, k4, k5, k6 = jax.random.split(key, 8)

    video = jax.random.normal(kv, (B, F, CIN_V, H, W), dtype=jnp.float32)
    audio = jax.random.normal(ka, (B, CIN_A, T_A), dtype=jnp.float32)

    # Parameters matching the PyTorch module:
    #   VideoConv: Conv2d(CIN_V, COUT_V, 3, padding='same')   (spatial)
    #              Conv1d(COUT_V, COUT_V, 3, padding='same')  (temporal)
    #   AudioConv: Conv1d(CIN_A, COUT_A, 3, padding='same')
    w_s = 0.1 * jax.random.normal(k1, (COUT_V, CIN_V, KSZ, KSZ), dtype=jnp.float32)
    b_s = 0.1 * jax.random.normal(k2, (COUT_V,), dtype=jnp.float32)
    w_t = 0.1 * jax.random.normal(k3, (COUT_V, COUT_V, KSZ), dtype=jnp.float32)
    b_t = 0.1 * jax.random.normal(k4, (COUT_V,), dtype=jnp.float32)
    w_a = 0.1 * jax.random.normal(k5, (COUT_A, CIN_A, KSZ), dtype=jnp.float32)
    b_a = 0.1 * jax.random.normal(k6, (COUT_A,), dtype=jnp.float32)

    v_out, a_out = initial_block(video, audio, w_s, b_s, w_t, b_t, w_a, b_a)
    v_out, a_out = jax.block_until_ready((v_out, a_out))

    v_ref, a_ref = reference(video, audio, w_s, b_s, w_t, b_t, w_a, b_a)
    assert v_out.shape == (B, F, COUT_V, H, W)
    assert a_out.shape == (B, COUT_A, T_A)
    assert jnp.allclose(v_out, v_ref, atol=1e-4, rtol=1e-4), (
        float(jnp.max(jnp.abs(v_out - v_ref))))
    assert jnp.allclose(a_out, a_ref, atol=1e-4, rtol=1e-4), (
        float(jnp.max(jnp.abs(a_out - a_ref))))

    print("KERNEL_OK")
</pallas_src>

<mosaic_0001>
module attributes {stable_mosaic.version = 11 : i64} {
  func.func @fused_kernel(%arg0: memref<112x2048xf32, #tpu.memory_space<vmem>>, %arg1: memref<8x112xf32, #tpu.memory_space<vmem>>, %arg2: memref<16x256xf32, #tpu.memory_space<vmem>>, %arg3: memref<8x16xf32, #tpu.memory_space<vmem>>, %arg4: memref<2x4x8x256xf32, #tpu.memory_space<vmem>>, %arg5: memref<2x8x128xf32, #tpu.memory_space<vmem>>) attributes {dimension_semantics = [], scalar_prefetch = 0 : i64, scratch_operands = 0 : i64, tpu.core_type = #tpu.core_type<tc>} {
    %c0 = arith.constant 0 : index
    %c0_0 = arith.constant 0 : index
    %0 = vector.load %arg1[%c0, %c0_0] : memref<8x112xf32, #tpu.memory_space<vmem>>, vector<8x112xf32>
    %c0_1 = arith.constant 0 : index
    %c0_2 = arith.constant 0 : index
    %1 = vector.load %arg0[%c0_1, %c0_2] : memref<112x2048xf32, #tpu.memory_space<vmem>>, vector<112x2048xf32>
    %cst = arith.constant dense<0.000000e+00> : vector<8x2048xf32>
    %2 = tpu.matmul %0, %1, %cst {dimension_numbers = #tpu.dot_dimension_numbers<[1], [0], [0], [1], [0, 0, 1, 1], [], []>} : vector<8x112xf32>, vector<112x2048xf32>, vector<8x2048xf32> -> vector<8x2048xf32>
    %3 = vector.extract_strided_slice %2 {offsets = [0, 0], sizes = [8, 256], strides = [1, 1]} : vector<8x2048xf32> to vector<8x256xf32>
    %c0_3 = arith.constant 0 : index
    %c0_4 = arith.constant 0 : index
    %c0_5 = arith.constant 0 : index
    %c0_6 = arith.constant 0 : index
    %4 = vector.load %arg4[%c0_3, %c0_4, %c0_5, %c0_6] : memref<2x4x8x256xf32, #tpu.memory_space<vmem>>, vector<1x1x8x256xf32>
    %5 = vector.shape_cast %4 : vector<1x1x8x256xf32> to vector<8x256xf32>
    %6 = vector.shape_cast %3 : vector<8x256xf32> to vector<1x1x8x256xf32>
    tpu.vector_store %arg4[%c0_3, %c0_4, %c0_5, %c0_6], %6 {strides = array<i32>} : memref<2x4x8x256xf32, #tpu.memory_space<vmem>>, vector<1x1x8x256xf32>,
    %7 = vector.extract_strided_slice %2 {offsets = [0, 256], sizes = [8, 256], strides = [1, 1]} : vector<8x2048xf32> to vector<8x256xf32>
    %c0_7 = arith.constant 0 : index
    %c1 = arith.constant 1 : index
    %c0_8 = arith.constant 0 : index
    %c0_9 = arith.constant 0 : index
    %8 = vector.load %arg4[%c0_7, %c1, %c0_8, %c0_9] : memref<2x4x8x256xf32, #tpu.memory_space<vmem>>, vector<1x1x8x256xf32>
    %9 = vector.shape_cast %8 : vector<1x1x8x256xf32> to vector<8x256xf32>
    %10 = vector.shape_cast %7 : vector<8x256xf32> to vector<1x1x8x256xf32>
    tpu.vector_store %arg4[%c0_7, %c1, %c0_8, %c0_9], %10 {strides = array<i32>} : memref<2x4x8x256xf32, #tpu.memory_space<vmem>>, vector<1x1x8x256xf32>,
    %11 = vector.extract_strided_slice %2 {offsets = [0, 512], sizes = [8, 256], strides = [1, 1]} : vector<8x2048xf32> to vector<8x256xf32>
    %c0_10 = arith.constant 0 : index
    %c2 = arith.constant 2 : index
    %c0_11 = arith.constant 0 : index
    %c0_12 = arith.constant 0 : index
    %12 = vector.load %arg4[%c0_10, %c2, %c0_11, %c0_12] : memref<2x4x8x256xf32, #tpu.memory_space<vmem>>, vector<1x1x8x256xf32>
    %13 = vector.shape_cast %12 : vector<1x1x8x256xf32> to vector<8x256xf32>
    %14 = vector.shape_cast %11 : vector<8x256xf32> to vector<1x1x8x256xf32>
    tpu.vector_store %arg4[%c0_10, %c2, %c0_11, %c0_12], %14 {strides = array<i32>} : memref<2x4x8x256xf32, #tpu.memory_space<vmem>>, vector<1x1x8x256xf32>,
    %15 = vector.extract_strided_slice %2 {offsets = [0, 768], sizes = [8, 256], strides = [1, 1]} : vector<8x2048xf32> to vector<8x256xf32>
    %c0_13 = arith.constant 0 : index
    %c3 = arith.constant 3 : index
    %c0_14 = arith.constant 0 : index
    %c0_15 = arith.constant 0 : index
    %16 = vector.load %arg4[%c0_13, %c3, %c0_14, %c0_15] : memref<2x4x8x256xf32, #tpu.memory_space<vmem>>, vector<1x1x8x256xf32>
    %17 = vector.shape_cast %16 : vector<1x1x8x256xf32> to vector<8x256xf32>
    %18 = vector.shape_cast %15 : vector<8x256xf32> to vector<1x1x8x256xf32>
    tpu.vector_store %arg4[%c0_13, %c3, %c0_14, %c0_15], %18 {strides = array<i32>} : memref<2x4x8x256xf32, #tpu.memory_space<vmem>>, vector<1x1x8x256xf32>,
    %19 = vector.extract_strided_slice %2 {offsets = [0, 1024], sizes = [8, 256], strides = [1, 1]} : vector<8x2048xf32> to vector<8x256xf32>
    %c1_16 = arith.constant 1 : index
    %c0_17 = arith.constant 0 : index
    %c0_18 = arith.constant 0 : index
    %c0_19 = arith.constant 0 : index
    %20 = vector.load %arg4[%c1_16, %c0_17, %c0_18, %c0_19] : memref<2x4x8x256xf32, #tpu.memory_space<vmem>>, vector<1x1x8x256xf32>
    %21 = vector.shape_cast %20 : vector<1x1x8x256xf32> to vector<8x256xf32>
    %22 = vector.shape_cast %19 : vector<8x256xf32> to vector<1x1x8x256xf32>
    tpu.vector_store %arg4[%c1_16, %c0_17, %c0_18, %c0_19], %22 {strides = array<i32>} : memref<2x4x8x256xf32, #tpu.memory_space<vmem>>, vector<1x1x8x256xf32>,
    %23 = vector.extract_strided_slice %2 {offsets = [0, 1280], sizes = [8, 256], strides = [1, 1]} : vector<8x2048xf32> to vector<8x256xf32>
    %c1_20 = arith.constant 1 : index
    %c1_21 = arith.constant 1 : index
    %c0_22 = arith.constant 0 : index
    %c0_23 = arith.constant 0 : index
    %24 = vector.load %arg4[%c1_20, %c1_21, %c0_22, %c0_23] : memref<2x4x8x256xf32, #tpu.memory_space<vmem>>, vector<1x1x8x256xf32>
    %25 = vector.shape_cast %24 : vector<1x1x8x256xf32> to vector<8x256xf32>
    %26 = vector.shape_cast %23 : vector<8x256xf32> to vector<1x1x8x256xf32>
    tpu.vector_store %arg4[%c1_20, %c1_21, %c0_22, %c0_23], %26 {strides = array<i32>} : memref<2x4x8x256xf32, #tpu.memory_space<vmem>>, vector<1x1x8x256xf32>,
    %27 = vector.extract_strided_slice %2 {offsets = [0, 1536], sizes = [8, 256], strides = [1, 1]} : vector<8x2048xf32> to vector<8x256xf32>
    %c1_24 = arith.constant 1 : index
    %c2_25 = arith.constant 2 : index
    %c0_26 = arith.constant 0 : index
    %c0_27 = arith.constant 0 : index
    %28 = vector.load %arg4[%c1_24, %c2_25, %c0_26, %c0_27] : memref<2x4x8x256xf32, #tpu.memory_space<vmem>>, vector<1x1x8x256xf32>
    %29 = vector.shape_cast %28 : vector<1x1x8x256xf32> to vector<8x256xf32>
    %30 = vector.shape_cast %27 : vector<8x256xf32> to vector<1x1x8x256xf32>
    tpu.vector_store %arg4[%c1_24, %c2_25, %c0_26, %c0_27], %30 {strides = array<i32>} : memref<2x4x8x256xf32, #tpu.memory_space<vmem>>, vector<1x1x8x256xf32>,
    %31 = vector.extract_strided_slice %2 {offsets = [0, 1792], sizes = [8, 256], strides = [1, 1]} : vector<8x2048xf32> to vector<8x256xf32>
    %c1_28 = arith.constant 1 : index
    %c3_29 = arith.constant 3 : index
    %c0_30 = arith.constant 0 : index
    %c0_31 = arith.constant 0 : index
    %32 = vector.load %arg4[%c1_28, %c3_29, %c0_30, %c0_31] : memref<2x4x8x256xf32, #tpu.memory_space<vmem>>, vector<1x1x8x256xf32>
    %33 = vector.shape_cast %32 : vector<1x1x8x256xf32> to vector<8x256xf32>
    %34 = vector.shape_cast %31 : vector<8x256xf32> to vector<1x1x8x256xf32>
    tpu.vector_store %arg4[%c1_28, %c3_29, %c0_30, %c0_31], %34 {strides = array<i32>} : memref<2x4x8x256xf32, #tpu.memory_space<vmem>>, vector<1x1x8x256xf32>,
    %c0_32 = arith.constant 0 : index
    %c0_33 = arith.constant 0 : index
    %35 = vector.load %arg3[%c0_32, %c0_33] : memref<8x16xf32, #tpu.memory_space<vmem>>, vector<8x16xf32>
    %c0_34 = arith.constant 0 : index
    %c0_35 = arith.constant 0 : index
    %36 = vector.load %arg2[%c0_34, %c0_35] : memref<16x256xf32, #tpu.memory_space<vmem>>, vector<16x256xf32>
    %cst_36 = arith.constant dense<0.000000e+00> : vector<8x256xf32>
    %37 = tpu.matmul %35, %36, %cst_36 {dimension_numbers = #tpu.dot_dimension_numbers<[1], [0], [0], [1], [0, 0, 1, 1], [], []>} : vector<8x16xf32>, vector<16x256xf32>, vector<8x256xf32> -> vector<8x256xf32>
    %38 = vector.extract_strided_slice %37 {offsets = [0, 0], sizes = [8, 128], strides = [1, 1]} : vector<8x256xf32> to vector<8x128xf32>
    %c0_37 = arith.constant 0 : index
    %c0_38 = arith.constant 0 : index
    %c0_39 = arith.constant 0 : index
    %39 = vector.load %arg5[%c0_37, %c0_38, %c0_39] : memref<2x8x128xf32, #tpu.memory_space<vmem>>, vector<1x8x128xf32>
    %40 = vector.shape_cast %39 : vector<1x8x128xf32> to vector<8x128xf32>
    %41 = vector.shape_cast %38 : vector<8x128xf32> to vector<1x8x128xf32>
    tpu.vector_store %arg5[%c0_37, %c0_38, %c0_39], %41 {strides = array<i32>} : memref<2x8x128xf32, #tpu.memory_space<vmem>>, vector<1x8x128xf32>,
    %42 = vector.extract_strided_slice %37 {offsets = [0, 128], sizes = [8, 128], strides = [1, 1]} : vector<8x256xf32> to vector<8x128xf32>
    %c1_40 = arith.constant 1 : index
    %c0_41 = arith.constant 0 : index
    %c0_42 = arith.constant 0 : index
    %43 = vector.load %arg5[%c1_40, %c0_41, %c0_42] : memref<2x8x128xf32, #tpu.memory_space<vmem>>, vector<1x8x128xf32>
    %44 = vector.shape_cast %43 : vector<1x8x128xf32> to vector<8x128xf32>
    %45 = vector.shape_cast %42 : vector<8x128xf32> to vector<1x8x128xf32>
    tpu.vector_store %arg5[%c1_40, %c0_41, %c0_42], %45 {strides = array<i32>} : memref<2x8x128xf32, #tpu.memory_space<vmem>>, vector<1x8x128xf32>,
    return
  }
}

</mosaic_0001>

<llo_original>
// kernel: tpu_custom_call.1
$region0: #{tpu_custom_call.1}
  #allocation0 [shape = 'u32[]', space=smem, size = 0x4, offset = 0x4, fixed_abs, tag = 'smem constant byte address 0x4 - core index']
  #allocation1 [shape = 'u32[72,128]{1,0:T(1,128)}', space=vmem, size = 0x9000, scoped, tag = 'internal scratch']
  %s0 = inlined_call_operand.hbm [shape: f32[112,2048], index: 0, kind: input, shape index: {}]
  %s1 = inlined_call_operand.hbm [shape: f32[8,112], index: 1, kind: input, shape index: {}]
  %s2 = inlined_call_operand.hbm [shape: f32[16,256], index: 2, kind: input, shape index: {}]
  %s3 = inlined_call_operand.hbm [shape: f32[8,16], index: 3, kind: input, shape index: {}]
  %s4 = inlined_call_operand.hbm [shape: f32[2,4,8,256], index: 4, kind: output, shape index: {0}]
  %s5 = inlined_call_operand.hbm [shape: f32[2,8,128], index: 5, kind: output, shape index: {1}]
  %6 = xla_tuple %s4, %s5
  %s7 = sld [smem:[#allocation0]]
  $region50: #{tpu_custom_call.1} parent=0
    _
  %s9 = ssub.s32 1, %s7
  %s10 = scalar_select 0, %s9, %s7
  $region1: #{tpu_custom_call.1} parent=0
    #allocation2 [shape = 'u8[917504]{0}', space=vmem, size = 0xe0000, scoped, tag = 'input window, operand 0, single buffered']
    #allocation3 [shape = 's32[1]{0}', space=sflag, size = 0x4, scoped, tag = 'scoped memory for tpu_custom_call.1']
    #allocation4 [shape = 's32[1]{0}', space=sflag, size = 0x4, scoped, tag = 'scoped memory for tpu_custom_call.1']
    #allocation5 [shape = 'u8[4096]{0}', space=vmem, size = 0x1000, scoped, tag = 'input window, operand 1, single buffered']
    #allocation6 [shape = 's32[1]{0}', space=sflag, size = 0x4, scoped, tag = 'scoped memory for tpu_custom_call.1']
    #allocation7 [shape = 'u8[16384]{0}', space=vmem, size = 0x4000, scoped, tag = 'input window, operand 2, single buffered']
    #allocation8 [shape = 'u8[4096]{0}', space=vmem, size = 0x1000, scoped, tag = 'input window, operand 3, single buffered']
    #allocation9 [shape = 's32[1]{0}', space=sflag, size = 0x4, scoped, tag = 'scoped memory for tpu_custom_call.1']
    #allocation10 [shape = 'u8[65536]{0}', space=vmem, size = 0x10000, scoped, tag = 'output window, operand 0, single buffered']
    #allocation11 [shape = 'u8[8192]{0}', space=vmem, size = 0x2000, scoped, tag = 'output window, operand 1, single buffered']
    #allocation12 [shape = 's32[1]{0}', space=sflag, size = 0x4, scoped, tag = 'scoped memory for tpu_custom_call.1']
    %11 = vsyncpa [#allocation3], 0
    %12 = vsyncpa [#allocation6], 0
    %13 = vsyncpa [#allocation9], 0
    %14 = vsyncpa [#allocation4], 0
    %15 = vsyncpa [#allocation12], 0
    // Predicated region
    $region2: #{tpu_custom_call.1} parent=1 // pred_check
      _
    $region3: #{tpu_custom_call.1} parent=1 // pred_check_branch
      %17 = sbr.rel (0) target = $region5
    $region4: #{tpu_custom_call.1} parent=1 // pred_region
      %19 = vsyncadd [#allocation3], 0
      %s20 = sshll.u32 %s0, 4
      %s21 = int_to_ptr.hbm [resolvable:$true] %s20
      %s22 = sshll.u32 [#allocation2], 4
      %s23 = int_to_ptr.vmem [resolvable:$true] %s22
      %28 = dma.hbm_to_vmem [thread:$0]  %s21, 28672, %s23, [#allocation3], 2048, 2048, 128
    $region5: #{tpu_custom_call.1} parent=1 // pred_fallthru
      _
    // Predicated region
    $region6: #{tpu_custom_call.1} parent=1 // pred_check
      _
    $region7: #{tpu_custom_call.1} parent=1 // pred_check_branch
      %30 = sbr.rel (0) target = $region9
    $region8: #{tpu_custom_call.1} parent=1 // pred_region
      %32 = vsyncadd [#allocation6], 0
      %s34 = sshll.u32 %s1, 4
      %s35 = int_to_ptr.hbm [resolvable:$true] %s34
      %s36 = sshll.u32 [#allocation5], 4
      %s37 = int_to_ptr.vmem [resolvable:$true] %s36
      %39 = dma.hbm_to_vmem [thread:$0]  %s35, 128, %s37, [#allocation6]
    $region9: #{tpu_custom_call.1} parent=1 // pred_fallthru
      _
    // Predicated region
    $region10: #{tpu_custom_call.1} parent=1 // pred_check
      _
    $region11: #{tpu_custom_call.1} parent=1 // pred_check_branch
      %41 = sbr.rel (0) target = $region13
    $region12: #{tpu_custom_call.1} parent=1 // pred_region
      %43 = vsyncadd [#allocation6], 0
      %s44 = sshll.u32 %s2, 4
      %s45 = int_to_ptr.hbm [resolvable:$true] %s44
      %s46 = sshll.u32 [#allocation7], 4
      %s47 = int_to_ptr.vmem [resolvable:$true] %s46
      %52 = dma.hbm_to_vmem [thread:$0]  %s45, 512, %s47, [#allocation6], 256, 256, 16
    $region13: #{tpu_custom_call.1} parent=1 // pred_fallthru
      _
    // Predicated region
    $region14: #{tpu_custom_call.1} parent=1 // pred_check
      _
    $region15: #{tpu_custom_call.1} parent=1 // pred_check_branch
      %54 = sbr.rel (0) target = $region17
    $region16: #{tpu_custom_call.1} parent=1 // pred_region
      %56 = vsyncadd [#allocation9], 0
      %s58 = sshll.u32 %s3, 4
      %s59 = int_to_ptr.hbm [resolvable:$true] %s58
      %s60 = sshll.u32 [#allocation8], 4
      %s61 = int_to_ptr.vmem [resolvable:$true] %s60
      %63 = dma.hbm_to_vmem [thread:$0]  %s59, 128, %s61, [#allocation9]
    $region17: #{tpu_custom_call.1} parent=1 // pred_fallthru
      _
    // Predicated region
    $region18: #{tpu_custom_call.1} parent=1 // pred_check
      _
    $region19: #{tpu_custom_call.1} parent=1 // pred_check_branch
      %65 = sbr.rel (0) target = $region21
    $region20: #{tpu_custom_call.1} parent=1 // pred_region
      %67 = dma.done [#allocation3], 28672
    $region21: #{tpu_custom_call.1} parent=1 // pred_fallthru
      _
    // Predicated region
    $region22: #{tpu_custom_call.1} parent=1 // pred_check
      _
    $region23: #{tpu_custom_call.1} parent=1 // pred_check_branch
      %69 = sbr.rel (0) target = $region25
    $region24: #{tpu_custom_call.1} parent=1 // pred_region
      %71 = dma.done [#allocation6], 128
    $region25: #{tpu_custom_call.1} parent=1 // pred_fallthru
      _
    // Predicated region
    $region26: #{tpu_custom_call.1} parent=1 // pred_check
      _
    $region27: #{tpu_custom_call.1} parent=1 // pred_check_branch
      %73 = sbr.rel (0) target = $region29
    $region28: #{tpu_custom_call.1} parent=1 // pred_region
      %75 = dma.done [#allocation6], 512
    $region29: #{tpu_custom_call.1} parent=1 // pred_fallthru
      _
    // Predicated region
    $region30: #{tpu_custom_call.1} parent=1 // pred_check
      _
    $region31: #{tpu_custom_call.1} parent=1 // pred_check_branch
      %77 = sbr.rel (0) target = $region33
    $region32: #{tpu_custom_call.1} parent=1 // pred_region
      %79 = dma.done [#allocation9], 128
    $region33: #{tpu_custom_call.1} parent=1 // pred_fallthru
      _
    %v80 = vld [vmem:[#allocation5] sm:$0xff]
    %v81 = vld [vmem:[#allocation2] sm:$0xff]
    %v82 = vld [vmem:[#allocation2 + $0x8] sm:$0xff]
    %v83 = vld [vmem:[#allocation2 + $0x10] sm:$0xff]
    %v84 = vld [vmem:[#allocation2 + $0x18] sm:$0xff]
    %v85 = vld [vmem:[#allocation2 + $0x20] sm:$0xff]
    %v86 = vld [vmem:[#allocation2 + $0x28] sm:$0xff]
    %v87 = vld [vmem:[#allocation2 + $0x30] sm:$0xff]
    %v88 = vld [vmem:[#allocation2 + $0x38] sm:$0xff]
    %v89 = vld [vmem:[#allocation2 + $0x40] sm:$0xff]
    %v90 = vld [vmem:[#allocation2 + $0x48] sm:$0xff]
    %v91 = vld [vmem:[#allocation2 + $0x50] sm:$0xff]
    %v92 = vld [vmem:[#allocation2 + $0x58] sm:$0xff]
    %v93 = vld [vmem:[#allocation2 + $0x60] sm:$0xff]
    %v94 = vld [vmem:[#allocation2 + $0x68] sm:$0xff]
    %v95 = vld [vmem:[#allocation2 + $0x70] sm:$0xff]
    %v96 = vld [vmem:[#allocation2 + $0x78] sm:$0xff]
    %v97 = vld [vmem:[#allocation2 + $0x80] sm:$0xff]
    %v98 = vld [vmem:[#allocation2 + $0x88] sm:$0xff]
    %v99 = vld [vmem:[#allocation2 + $0x90] sm:$0xff]
    %v100 = vld [vmem:[#allocation2 + $0x98] sm:$0xff]
    %v101 = vld [vmem:[#allocation2 + $0xa0] sm:$0xff]
    %v102 = vld [vmem:[#allocation2 + $0xa8] sm:$0xff]
    %v103 = vld [vmem:[#allocation2 + $0xb0] sm:$0xff]
    %v104 = vld [vmem:[#allocation2 + $0xb8] sm:$0xff]
    %v105 = vld [vmem:[#allocation2 + $0xc0] sm:$0xff]
    %v106 = vld [vmem:[#allocation2 + $0xc8] sm:$0xff]
    %v107 = vld [vmem:[#allocation2 + $0xd0] sm:$0xff]
    %v108 = vld [vmem:[#allocation2 + $0xd8] sm:$0xff]
    %v109 = vld [vmem:[#allocation2 + $0xe0] sm:$0xff]
    %v110 = vld [vmem:[#allocation2 + $0xe8] sm:$0xff]
    %v111 = vld [vmem:[#allocation2 + $0xf0] sm:$0xff]
    %v112 = vld [vmem:[#allocation2 + $0xf8] sm:$0xff]
    %v113 = vld [vmem:[#allocation2 + $0x100] sm:$0xff]
    %v114 = vld [vmem:[#allocation2 + $0x108] sm:$0xff]
    %v115 = vld [vmem:[#allocation2 + $0x110] sm:$0xff]
    %v116 = vld [vmem:[#allocation2 + $0x118] sm:$0xff]
    %v117 = vld [vmem:[#allocation2 + $0x120] sm:$0xff]
    %v118 = vld [vmem:[#allocation2 + $0x128] sm:$0xff]
    %v119 = vld [vmem:[#allocation2 + $0x130] sm:$0xff]
    %v120 = vld [vmem:[#allocation2 + $0x138] sm:$0xff]
    %v121 = vld [vmem:[#allocation2 + $0x140] sm:$0xff]
    %v122 = vld [vmem:[#allocation2 + $0x148] sm:$0xff]
    %v123 = vld [vmem:[#allocation2 + $0x150] sm:$0xff]
    %v124 = vld [vmem:[#allocation2 + $0x158] sm:$0xff]
    %v125 = vld [vmem:[#allocation2 + $0x160] sm:$0xff]
    %v126 = vld [vmem:[#allocation2 + $0x168] sm:$0xff]
    %v127 = vld [vmem:[#allocation2 + $0x170] sm:$0xff]
    %v128 = vld [vmem:[#allocation2 + $0x178] sm:$0xff]
    %v129 = vld [vmem:[#allocation2 + $0x180] sm:$0xff]
    %v130 = vld [vmem:[#allocation2 + $0x188] sm:$0xff]
    %v131 = vld [vmem:[#allocation2 + $0x190] sm:$0xff]
    %v132 = vld [vmem:[#allocation2 + $0x198] sm:$0xff]
    %v133 = vld [vmem:[#allocation2 + $0x1a0] sm:$0xff]
    %v134 = vld [vmem:[#allocation2 + $0x1a8] sm:$0xff]
    %v135 = vld [vmem:[#allocation2 + $0x1b0] sm:$0xff]
    %v136 = vld [vmem:[#allocation2 + $0x1b8] sm:$0xff]
    %v137 = vld [vmem:[#allocation2 + $0x1c0] sm:$0xff]
    %v138 = vld [vmem:[#allocation2 + $0x1c8] sm:$0xff]
    %v139 = vld [vmem:[#allocation2 + $0x1d0] sm:$0xff]
    %v140 = vld [vmem:[#allocation2 + $0x1d8] sm:$0xff]
    %v141 = vld [vmem:[#allocation2 + $0x1e0] sm:$0xff]
    %v142 = vld [vmem:[#allocation2 + $0x1e8] sm:$0xff]
    %v143 = vld [vmem:[#allocation2 + $0x1f0] sm:$0xff]
    %v144 = vld [vmem:[#allocation2 + $0x1f8] sm:$0xff]
    %v145 = vld [vmem:[#allocation2 + $0x200] sm:$0xff]
    %v146 = vld [vmem:[#allocation2 + $0x208] sm:$0xff]
    %v147 = vld [vmem:[#allocation2 + $0x210] sm:$0xff]
    %v148 = vld [vmem:[#allocation2 + $0x218] sm:$0xff]
    %v149 = vld [vmem:[#allocation2 + $0x220] sm:$0xff]
    %v150 = vld [vmem:[#allocation2 + $0x228] sm:$0xff]
    %v151 = vld [vmem:[#allocation2 + $0x230] sm:$0xff]
    %v152 = vld [vmem:[#allocation2 + $0x238] sm:$0xff]
    %v153 = vld [vmem:[#allocation2 + $0x240] sm:$0xff]
    %v154 = vld [vmem:[#allocation2 + $0x248] sm:$0xff]
    %v155 = vld [vmem:[#allocation2 + $0x250] sm:$0xff]
    %v156 = vld [vmem:[#allocation2 + $0x258] sm:$0xff]
    %v157 = vld [vmem:[#allocation2 + $0x260] sm:$0xff]
    %v158 = vld [vmem:[#allocation2 + $0x268] sm:$0xff]
    %v159 = vld [vmem:[#allocation2 + $0x270] sm:$0xff]
    %v160 = vld [vmem:[#allocation2 + $0x278] sm:$0xff]
    %v161 = vld [vmem:[#allocation2 + $0x280] sm:$0xff]
    %v162 = vld [vmem:[#allocation2 + $0x288] sm:$0xff]
    %v163 = vld [vmem:[#allocation2 + $0x290] sm:$0xff]
    %v164 = vld [vmem:[#allocation2 + $0x298] sm:$0xff]
    %v165 = vld [vmem:[#allocation2 + $0x2a0] sm:$0xff]
    %v166 = vld [vmem:[#allocation2 + $0x2a8] sm:$0xff]
    %v167 = vld [vmem:[#allocation2 + $0x2b0] sm:$0xff]
    %v168 = vld [vmem:[#allocation2 + $0x2b8] sm:$0xff]
    %v169 = vld [vmem:[#allocation2 + $0x2c0] sm:$0xff]
    %v170 = vld [vmem:[#allocation2 + $0x2c8] sm:$0xff]
    %v171 = vld [vmem:[#allocation2 + $0x2d0] sm:$0xff]
    %v172 = vld [vmem:[#allocation2 + $0x2d8] sm:$0xff]
    %v173 = vld [vmem:[#allocation2 + $0x2e0] sm:$0xff]
    %v174 = vld [vmem:[#allocation2 + $0x2e8] sm:$0xff]
    %v175 = vld [vmem:[#allocation2 + $0x2f0] sm:$0xff]
    %v176 = vld [vmem:[#allocation2 + $0x2f8] sm:$0xff]
    %v177 = vld [vmem:[#allocation2 + $0x300] sm:$0xff]
    %v178 = vld [vmem:[#allocation2 + $0x308] sm:$0xff]
    %v179 = vld [vmem:[#allocation2 + $0x310] sm:$0xff]
    %v180 = vld [vmem:[#allocation2 + $0x318] sm:$0xff]
    %v181 = vld [vmem:[#allocation2 + $0x320] sm:$0xff]
    %v182 = vld [vmem:[#allocation2 + $0x328] sm:$0xff]
    %v183 = vld [vmem:[#allocation2 + $0x330] sm:$0xff]
    %v184 = vld [vmem:[#allocation2 + $0x338] sm:$0xff]
    %v185 = vld [vmem:[#allocation2 + $0x340] sm:$0xff]
    %v186 = vld [vmem:[#allocation2 + $0x348] sm:$0xff]
    %v187 = vld [vmem:[#allocation2 + $0x350] sm:$0xff]
    %v188 = vld [vmem:[#allocation2 + $0x358] sm:$0xff]
    %v189 = vld [vmem:[#allocation2 + $0x360] sm:$0xff]
    %v190 = vld [vmem:[#allocation2 + $0x368] sm:$0xff]
    %v191 = vld [vmem:[#allocation2 + $0x370] sm:$0xff]
    %v192 = vld [vmem:[#allocation2 + $0x378] sm:$0xff]
    %v193 = vld [vmem:[#allocation2 + $0x380] sm:$0xff]
    %v194 = vld [vmem:[#allocation2 + $0x388] sm:$0xff]
    %v195 = vld [vmem:[#allocation2 + $0x390] sm:$0xff]
    %v196 = vld [vmem:[#allocation2 + $0x398] sm:$0xff]
    %v197 = vld [vmem:[#allocation2 + $0x3a0] sm:$0xff]
    %v198 = vld [vmem:[#allocation2 + $0x3a8] sm:$0xff]
    %v199 = vld [vmem:[#allocation2 + $0x3b0] sm:$0xff]
    %v200 = vld [vmem:[#allocation2 + $0x3b8] sm:$0xff]
    %v201 = vld [vmem:[#allocation2 + $0x3c0] sm:$0xff]
    %v202 = vld [vmem:[#allocation2 + $0x3c8] sm:$0xff]
    %v203 = vld [vmem:[#allocation2 + $0x3d0] sm:$0xff]
    %v204 = vld [vmem:[#allocation2 + $0x3d8] sm:$0xff]
    %v205 = vld [vmem:[#allocation2 + $0x3e0] sm:$0xff]
    %v206 = vld [vmem:[#allocation2 + $0x3e8] sm:$0xff]
    %v207 = vld [vmem:[#allocation2 + $0x3f0] sm:$0xff]
    %v208 = vld [vmem:[#allocation2 + $0x3f8] sm:$0xff]
    %v209 = vld [vmem:[#allocation2 + $0x400] sm:$0xff]
    %v210 = vld [vmem:[#allocation2 + $0x408] sm:$0xff]
    %v211 = vld [vmem:[#allocation2 + $0x410] sm:$0xff]
    %v212 = vld [vmem:[#allocation2 + $0x418] sm:$0xff]
    %v213 = vld [vmem:[#allocation2 + $0x420] sm:$0xff]
    %v214 = vld [vmem:[#allocation2 + $0x428] sm:$0xff]
    %v215 = vld [vmem:[#allocation2 + $0x430] sm:$0xff]
    %v216 = vld [vmem:[#allocation2 + $0x438] sm:$0xff]
    %v217 = vld [vmem:[#allocation2 + $0x440] sm:$0xff]
    %v218 = vld [vmem:[#allocation2 + $0x448] sm:$0xff]
    %v219 = vld [vmem:[#allocation2 + $0x450] sm:$0xff]
    %v220 = vld [vmem:[#allocation2 + $0x458] sm:$0xff]
    %v221 = vld [vmem:[#allocation2 + $0x460] sm:$0xff]
    %v222 = vld [vmem:[#allocation2 + $0x468] sm:$0xff]
    %v223 = vld [vmem:[#allocation2 + $0x470] sm:$0xff]
    %v224 = vld [vmem:[#allocation2 + $0x478] sm:$0xff]
    %v225 = vld [vmem:[#allocation2 + $0x480] sm:$0xff]
    %v226 = vld [vmem:[#allocation2 + $0x488] sm:$0xff]
    %v227 = vld [vmem:[#allocation2 + $0x490] sm:$0xff]
    %v228 = vld [vmem:[#allocation2 + $0x498] sm:$0xff]
    %v229 = vld [vmem:[#allocation2 + $0x4a0] sm:$0xff]
    %v230 = vld [vmem:[#allocation2 + $0x4a8] sm:$0xff]
    %v231 = vld [vmem:[#allocation2 + $0x4b0] sm:$0xff]
    %v232 = vld [vmem:[#allocation2 + $0x4b8] sm:$0xff]
    %v233 = vld [vmem:[#allocation2 + $0x4c0] sm:$0xff]
    %v234 = vld [vmem:[#allocation2 + $0x4c8] sm:$0xff]
    %v235 = vld [vmem:[#allocation2 + $0x4d0] sm:$0xff]
    %v236 = vld [vmem:[#allocation2 + $0x4d8] sm:$0xff]
    %v237 = vld [vmem:[#allocation2 + $0x4e0] sm:$0xff]
    %v238 = vld [vmem:[#allocation2 + $0x4e8] sm:$0xff]
    %v239 = vld [vmem:[#allocation2 + $0x4f0] sm:$0xff]
    %v240 = vld [vmem:[#allocation2 + $0x4f8] sm:$0xff]
    %v241 = vld [vmem:[#allocation2 + $0x500] sm:$0xff]
    %v242 = vld [vmem:[#allocation2 + $0x508] sm:$0xff]
    %v243 = vld [vmem:[#allocation2 + $0x510] sm:$0xff]
    %v244 = vld [vmem:[#allocation2 + $0x518] sm:$0xff]
    %v245 = vld [vmem:[#allocation2 + $0x520] sm:$0xff]
    %v246 = vld [vmem:[#allocation2 + $0x528] sm:$0xff]
    %v247 = vld [vmem:[#allocation2 + $0x530] sm:$0xff]
    %v248 = vld [vmem:[#allocation2 + $0x538] sm:$0xff]
    %v249 = vld [vmem:[#allocation2 + $0x540] sm:$0xff]
    %v250 = vld [vmem:[#allocation2 + $0x548] sm:$0xff]
    %v251 = vld [vmem:[#allocation2 + $0x550] sm:$0xff]
    %v252 = vld [vmem:[#allocation2 + $0x558] sm:$0xff]
    %v253 = vld [vmem:[#allocation2 + $0x560] sm:$0xff]
    %v254 = vld [vmem:[#allocation2 + $0x568] sm:$0xff]
    %v255 = vld [vmem:[#allocation2 + $0x570] sm:$0xff]
    %v256 = vld [vmem:[#allocation2 + $0x578] sm:$0xff]
    %v257 = vld [vmem:[#allocation2 + $0x580] sm:$0xff]
    %v258 = vld [vmem:[#allocation2 + $0x588] sm:$0xff]
    %v259 = vld [vmem:[#allocation2 + $0x590] sm:$0xff]
    %v260 = vld [vmem:[#allocation2 + $0x598] sm:$0xff]
    %v261 = vld [vmem:[#allocation2 + $0x5a0] sm:$0xff]
    %v262 = vld [vmem:[#allocation2 + $0x5a8] sm:$0xff]
    %v263 = vld [vmem:[#allocation2 + $0x5b0] sm:$0xff]
    %v264 = vld [vmem:[#allocation2 + $0x5b8] sm:$0xff]
    %v265 = vld [vmem:[#allocation2 + $0x5c0] sm:$0xff]
    %v266 = vld [vmem:[#allocation2 + $0x5c8] sm:$0xff]
    %v267 = vld [vmem:[#allocation2 + $0x5d0] sm:$0xff]
    %v268 = vld [vmem:[#allocation2 + $0x5d8] sm:$0xff]
    %v269 = vld [vmem:[#allocation2 + $0x5e0] sm:$0xff]
    %v270 = vld [vmem:[#allocation2 + $0x5e8] sm:$0xff]
    %v271 = vld [vmem:[#allocation2 + $0x5f0] sm:$0xff]
    %v272 = vld [vmem:[#allocation2 + $0x5f8] sm:$0xff]
    %v273 = vld [vmem:[#allocation2 + $0x600] sm:$0xff]
    %v274 = vld [vmem:[#allocation2 + $0x608] sm:$0xff]
    %v275 = vld [vmem:[#allocation2 + $0x610] sm:$0xff]
    %v276 = vld [vmem:[#allocation2 + $0x618] sm:$0xff]
    %v277 = vld [vmem:[#allocation2 + $0x620] sm:$0xff]
    %v278 = vld [vmem:[#allocation2 + $0x628] sm:$0xff]
    %v279 = vld [vmem:[#allocation2 + $0x630] sm:$0xff]
    %v280 = vld [vmem:[#allocation2 + $0x638] sm:$0xff]
    %v281 = vld [vmem:[#allocation2 + $0x640] sm:$0xff]
    %v282 = vld [vmem:[#allocation2 + $0x648] sm:$0xff]
    %v283 = vld [vmem:[#allocation2 + $0x650] sm:$0xff]
    %v284 = vld [vmem:[#allocation2 + $0x658] sm:$0xff]
    %v285 = vld [vmem:[#allocation2 + $0x660] sm:$0xff]
    %v286 = vld [vmem:[#allocation2 + $0x668] sm:$0xff]
    %v287 = vld [vmem:[#allocation2 + $0x670] sm:$0xff]
    %v288 = vld [vmem:[#allocation2 + $0x678] sm:$0xff]
    %v289 = vld [vmem:[#allocation2 + $0x680] sm:$0xff]
    %v290 = vld [vmem:[#allocation2 + $0x688] sm:$0xff]
    %v291 = vld [vmem:[#allocation2 + $0x690] sm:$0xff]
    %v292 = vld [vmem:[#allocation2 + $0x698] sm:$0xff]
    %v293 = vld [vmem:[#allocation2 + $0x6a0] sm:$0xff]
    %v294 = vld [vmem:[#allocation2 + $0x6a8] sm:$0xff]
    %v295 = vld [vmem:[#allocation2 + $0x6b0] sm:$0xff]
    %v296 = vld [vmem:[#allocation2 + $0x6b8] sm:$0xff]
    %v297 = vld [vmem:[#allocation2 + $0x6c0] sm:$0xff]
    %v298 = vld [vmem:[#allocation2 + $0x6c8] sm:$0xff]
    %v299 = vld [vmem:[#allocation2 + $0x6d0] sm:$0xff]
    %v300 = vld [vmem:[#allocation2 + $0x6d8] sm:$0xff]
    %v301 = vld [vmem:[#allocation2 + $0x6e0] sm:$0xff]
    %v302 = vld [vmem:[#allocation2 + $0x6e8] sm:$0xff]
    %v303 = vld [vmem:[#allocation2 + $0x6f0] sm:$0xff]
    %v304 = vld [vmem:[#allocation2 + $0x6f8] sm:$0xff]
    %vm305 = vcmask 916480
    %v307 = vsel %vm305, %v80, 0
    %309 = vmatpush.msra.mxu0 0.0
    %310 = vmatpush.msra.mxu0 0.0
    %311 = vmatpush.msra.mxu0 %v289
    %312 = vmatpush.msra.mxu0 %v273
    %313 = vmatpush.msra.mxu0 %v257
    %314 = vmatpush.msra.mxu0 %v241
    %315 = vmatpush.msra.mxu0 %v225
    %316 = vmatpush.msra.mxu0 %v209
    %317 = vmatpush.msra.mxu0 %v193
    %318 = vmatpush.msra.mxu0 %v177
    %319 = vmatpush.msra.mxu0 %v161
    %320 = vmatpush.msra.mxu0 %v145
    %321 = vmatpush.msra.mxu0 %v129
    %322 = vmatpush.msra.mxu0 %v113
    %323 = vmatpush.msra.mxu0 %v97
    %324 = vmatpush.msra.mxu0 %v81
    %325 = vmatmul.f32.gmra.mxu0 %v307
    %v326 = vpop.f32.mrf.mxu0
    %v327 = vadd.f32 0.0, %v326
    %328 = vdwg.mxu0
    %329 = vmatpush.msra.mxu0 0.0
    %330 = vmatpush.msra.mxu0 0.0
    %331 = vmatpush.msra.mxu0 %v290
    %332 = vmatpush.msra.mxu0 %v274
    %333 = vmatpush.msra.mxu0 %v258
    %334 = vmatpush.msra.mxu0 %v242
    %335 = vmatpush.msra.mxu0 %v226
    %336 = vmatpush.msra.mxu0 %v210
    %337 = vmatpush.msra.mxu0 %v194
    %338 = vmatpush.msra.mxu0 %v178
    %339 = vmatpush.msra.mxu0 %v162
    %340 = vmatpush.msra.mxu0 %v146
    %341 = vmatpush.msra.mxu0 %v130
    %342 = vmatpush.msra.mxu0 %v114
    %343 = vmatpush.msra.mxu0 %v98
    %344 = vmatpush.msra.mxu0 %v82
    %345 = vmatmul.f32.gmra.mxu0 %v307
    %v346 = vpop.f32.mrf.mxu0
    %v347 = vadd.f32 0.0, %v346
    %348 = vdwg.mxu0
    %349 = vmatpush.msra.mxu0 0.0
    %350 = vmatpush.msra.mxu0 0.0
    %351 = vmatpush.msra.mxu0 %v291
    %352 = vmatpush.msra.mxu0 %v275
    %353 = vmatpush.msra.mxu0 %v259
    %354 = vmatpush.msra.mxu0 %v243
    %355 = vmatpush.msra.mxu0 %v227
    %356 = vmatpush.msra.mxu0 %v211
    %357 = vmatpush.msra.mxu0 %v195
    %358 = vmatpush.msra.mxu0 %v179
    %359 = vmatpush.msra.mxu0 %v163
    %360 = vmatpush.msra.mxu0 %v147
    %361 = vmatpush.msra.mxu0 %v131
    %362 = vmatpush.msra.mxu0 %v115
    %363 = vmatpush.msra.mxu0 %v99
    %364 = vmatpush.msra.mxu0 %v83
    %365 = vmatmul.f32.gmra.mxu0 %v307
    %v366 = vpop.f32.mrf.mxu0
    %v367 = vadd.f32 0.0, %v366
    %368 = vdwg.mxu0
    %369 = vmatpush.msra.mxu0 0.0
    %370 = vmatpush.msra.mxu0 0.0
    %371 = vmatpush.msra.mxu0 %v292
    %372 = vmatpush.msra.mxu0 %v276
    %373 = vmatpush.msra.mxu0 %v260
    %374 = vmatpush.msra.mxu0 %v244
    %375 = vmatpush.msra.mxu0 %v228
    %376 = vmatpush.msra.mxu0 %v212
    %377 = vmatpush.msra.mxu0 %v196
    %378 = vmatpush.msra.mxu0 %v180
    %379 = vmatpush.msra.mxu0 %v164
    %380 = vmatpush.msra.mxu0 %v148
    %381 = vmatpush.msra.mxu0 %v132
    %382 = vmatpush.msra.mxu0 %v116
    %383 = vmatpush.msra.mxu0 %v100
    %384 = vmatpush.msra.mxu0 %v84
    %385 = vmatmul.f32.gmra.mxu0 %v307
    %v386 = vpop.f32.mrf.mxu0
    %v387 = vadd.f32 0.0, %v386
    %388 = vdwg.mxu0
    %389 = vmatpush.msra.mxu0 0.0
    %390 = vmatpush.msra.mxu0 0.0
    %391 = vmatpush.msra.mxu0 %v293
    %392 = vmatpush.msra.mxu0 %v277
    %393 = vmatpush.msra.mxu0 %v261
    %394 = vmatpush.msra.mxu0 %v245
    %395 = vmatpush.msra.mxu0 %v229
    %396 = vmatpush.msra.mxu0 %v213
    %397 = vmatpush.msra.mxu0 %v197
    %398 = vmatpush.msra.mxu0 %v181
    %399 = vmatpush.msra.mxu0 %v165
    %400 = vmatpush.msra.mxu0 %v149
    %401 = vmatpush.msra.mxu0 %v133
    %402 = vmatpush.msra.mxu0 %v117
    %403 = vmatpush.msra.mxu0 %v101
    %404 = vmatpush.msra.mxu0 %v85
    %405 = vmatmul.f32.gmra.mxu0 %v307
    %v406 = vpop.f32.mrf.mxu0
    %v407 = vadd.f32 0.0, %v406
    %408 = vdwg.mxu0
    %409 = vmatpush.msra.mxu0 0.0
    %410 = vmatpush.msra.mxu0 0.0
    %411 = vmatpush.msra.mxu0 %v294
    %412 = vmatpush.msra.mxu0 %v278
    %413 = vmatpush.msra.mxu0 %v262
    %414 = vmatpush.msra.mxu0 %v246
    %415 = vmatpush.msra.mxu0 %v230
    %416 = vmatpush.msra.mxu0 %v214
    %417 = vmatpush.msra.mxu0 %v198
    %418 = vmatpush.msra.mxu0 %v182
    %419 = vmatpush.msra.mxu0 %v166
    %420 = vmatpush.msra.mxu0 %v150
    %421 = vmatpush.msra.mxu0 %v134
    %422 = vmatpush.msra.mxu0 %v118
    %423 = vmatpush.msra.mxu0 %v102
    %424 = vmatpush.msra.mxu0 %v86
    %425 = vmatmul.f32.gmra.mxu0 %v307
    %v426 = vpop.f32.mrf.mxu0
    %v427 = vadd.f32 0.0, %v426
    %428 = vdwg.mxu0
    %429 = vmatpush.msra.mxu0 0.0
    %430 = vmatpush.msra.mxu0 0.0
    %431 = vmatpush.msra.mxu0 %v295
    %432 = vmatpush.msra.mxu0 %v279
    %433 = vmatpush.msra.mxu0 %v263
    %434 = vmatpush.msra.mxu0 %v247
    %435 = vmatpush.msra.mxu0 %v231
    %436 = vmatpush.msra.mxu0 %v215
    %437 = vmatpush.msra.mxu0 %v199
    %438 = vmatpush.msra.mxu0 %v183
    %439 = vmatpush.msra.mxu0 %v167
    %440 = vmatpush.msra.mxu0 %v151
    %441 = vmatpush.msra.mxu0 %v135
    %442 = vmatpush.msra.mxu0 %v119
    %443 = vmatpush.msra.mxu0 %v103
    %444 = vmatpush.msra.mxu0 %v87
    %445 = vmatmul.f32.gmra.mxu0 %v307
    %v446 = vpop.f32.mrf.mxu0
    %v447 = vadd.f32 0.0, %v446
    %448 = vdwg.mxu0
    %449 = vmatpush.msra.mxu0 0.0
    %450 = vmatpush.msra.mxu0 0.0
    %451 = vmatpush.msra.mxu0 %v296
    %452 = vmatpush.msra.mxu0 %v280
    %453 = vmatpush.msra.mxu0 %v264
    %454 = vmatpush.msra.mxu0 %v248
    %455 = vmatpush.msra.mxu0 %v232
    %456 = vmatpush.msra.mxu0 %v216
    %457 = vmatpush.msra.mxu0 %v200
    %458 = vmatpush.msra.mxu0 %v184
    %459 = vmatpush.msra.mxu0 %v168
    %460 = vmatpush.msra.mxu0 %v152
    %461 = vmatpush.msra.mxu0 %v136
    %462 = vmatpush.msra.mxu0 %v120
    %463 = vmatpush.msra.mxu0 %v104
    %464 = vmatpush.msra.mxu0 %v88
    %465 = vmatmul.f32.gmra.mxu0 %v307
    %v466 = vpop.f32.mrf.mxu0
    %v467 = vadd.f32 0.0, %v466
    %468 = vdwg.mxu0
    %469 = vmatpush.msra.mxu0 0.0
    %470 = vmatpush.msra.mxu0 0.0
    %471 = vmatpush.msra.mxu0 %v297
    %472 = vmatpush.msra.mxu0 %v281
    %473 = vmatpush.msra.mxu0 %v265
    %474 = vmatpush.msra.mxu0 %v249
    %475 = vmatpush.msra.mxu0 %v233
    %476 = vmatpush.msra.mxu0 %v217
    %477 = vmatpush.msra.mxu0 %v201
    %478 = vmatpush.msra.mxu0 %v185
    %479 = vmatpush.msra.mxu0 %v169
    %480 = vmatpush.msra.mxu0 %v153
    %481 = vmatpush.msra.mxu0 %v137
    %482 = vmatpush.msra.mxu0 %v121
    %483 = vmatpush.msra.mxu0 %v105
    %484 = vmatpush.msra.mxu0 %v89
    %485 = vmatmul.f32.gmra.mxu0 %v307
    %v486 = vpop.f32.mrf.mxu0
    %v487 = vadd.f32 0.0, %v486
    %488 = vdwg.mxu0
    %489 = vmatpush.msra.mxu0 0.0
    %490 = vmatpush.msra.mxu0 0.0
    %491 = vmatpush.msra.mxu0 %v298
    %492 = vmatpush.msra.mxu0 %v282
    %493 = vmatpush.msra.mxu0 %v266
    %494 = vmatpush.msra.mxu0 %v250
    %495 = vmatpush.msra.mxu0 %v234
    %496 = vmatpush.msra.mxu0 %v218
    %497 = vmatpush.msra.mxu0 %v202
    %498 = vmatpush.msra.mxu0 %v186
    %499 = vmatpush.msra.mxu0 %v170
    %500 = vmatpush.msra.mxu0 %v154
    %501 = vmatpush.msra.mxu0 %v138
    %502 = vmatpush.msra.mxu0 %v122
    %503 = vmatpush.msra.mxu0 %v106
    %504 = vmatpush.msra.mxu0 %v90
    %505 = vmatmul.f32.gmra.mxu0 %v307
    %v506 = vpop.f32.mrf.mxu0
    %v507 = vadd.f32 0.0, %v506
    %508 = vdwg.mxu0
    %509 = vmatpush.msra.mxu0 0.0
    %510 = vmatpush.msra.mxu0 0.0
    %511 = vmatpush.msra.mxu0 %v299
    %512 = vmatpush.msra.mxu0 %v283
    %513 = vmatpush.msra.mxu0 %v267
    %514 = vmatpush.msra.mxu0 %v251
    %515 = vmatpush.msra.mxu0 %v235
    %516 = vmatpush.msra.mxu0 %v219
    %517 = vmatpush.msra.mxu0 %v203
    %518 = vmatpush.msra.mxu0 %v187
    %519 = vmatpush.msra.mxu0 %v171
    %520 = vmatpush.msra.mxu0 %v155
    %521 = vmatpush.msra.mxu0 %v139
    %522 = vmatpush.msra.mxu0 %v123
    %523 = vmatpush.msra.mxu0 %v107
    %524 = vmatpush.msra.mxu0 %v91
    %525 = vmatmul.f32.gmra.mxu0 %v307
    %v526 = vpop.f32.mrf.mxu0
    %v527 = vadd.f32 0.0, %v526
    %528 = vdwg.mxu0
    %529 = vmatpush.msra.mxu0 0.0
    %530 = vmatpush.msra.mxu0 0.0
    %531 = vmatpush.msra.mxu0 %v300
    %532 = vmatpush.msra.mxu0 %v284
    %533 = vmatpush.msra.mxu0 %v268
    %534 = vmatpush.msra.mxu0 %v252
    %535 = vmatpush.msra.mxu0 %v236
    %536 = vmatpush.msra.mxu0 %v220
    %537 = vmatpush.msra.mxu0 %v204
    %538 = vmatpush.msra.mxu0 %v188
    %539 = vmatpush.msra.mxu0 %v172
    %540 = vmatpush.msra.mxu0 %v156
    %541 = vmatpush.msra.mxu0 %v140
    %542 = vmatpush.msra.mxu0 %v124
    %543 = vmatpush.msra.mxu0 %v108
    %544 = vmatpush.msra.mxu0 %v92
    %545 = vmatmul.f32.gmra.mxu0 %v307
    %v546 = vpop.f32.mrf.mxu0
    %v547 = vadd.f32 0.0, %v546
    %548 = vdwg.mxu0
    %549 = vmatpush.msra.mxu0 0.0
    %550 = vmatpush.msra.mxu0 0.0
    %551 = vmatpush.msra.mxu0 %v301
    %552 = vmatpush.msra.mxu0 %v285
    %553 = vmatpush.msra.mxu0 %v269
    %554 = vmatpush.msra.mxu0 %v253
    %555 = vmatpush.msra.mxu0 %v237
    %556 = vmatpush.msra.mxu0 %v221
    %557 = vmatpush.msra.mxu0 %v205
    %558 = vmatpush.msra.mxu0 %v189
    %559 = vmatpush.msra.mxu0 %v173
    %560 = vmatpush.msra.mxu0 %v157
    %561 = vmatpush.msra.mxu0 %v141
    %562 = vmatpush.msra.mxu0 %v125
    %563 = vmatpush.msra.mxu0 %v109
    %564 = vmatpush.msra.mxu0 %v93
    %565 = vmatmul.f32.gmra.mxu0 %v307
    %v566 = vpop.f32.mrf.mxu0
    %v567 = vadd.f32 0.0, %v566
    %568 = vdwg.mxu0
    %569 = vmatpush.msra.mxu0 0.0
    %570 = vmatpush.msra.mxu0 0.0
    %571 = vmatpush.msra.mxu0 %v302
    %572 = vmatpush.msra.mxu0 %v286
    %573 = vmatpush.msra.mxu0 %v270
    %574 = vmatpush.msra.mxu0 %v254
    %575 = vmatpush.msra.mxu0 %v238
    %576 = vmatpush.msra.mxu0 %v222
    %577 = vmatpush.msra.mxu0 %v206
    %578 = vmatpush.msra.mxu0 %v190
    %579 = vmatpush.msra.mxu0 %v174
    %580 = vmatpush.msra.mxu0 %v158
    %581 = vmatpush.msra.mxu0 %v142
    %582 = vmatpush.msra.mxu0 %v126
    %583 = vmatpush.msra.mxu0 %v110
    %584 = vmatpush.msra.mxu0 %v94
    %585 = vmatmul.f32.gmra.mxu0 %v307
    %v586 = vpop.f32.mrf.mxu0
    %v587 = vadd.f32 0.0, %v586
    %588 = vdwg.mxu0
    %589 = vmatpush.msra.mxu0 0.0
    %590 = vmatpush.msra.mxu0 0.0
    %591 = vmatpush.msra.mxu0 %v303
    %592 = vmatpush.msra.mxu0 %v287
    %593 = vmatpush.msra.mxu0 %v271
    %594 = vmatpush.msra.mxu0 %v255
    %595 = vmatpush.msra.mxu0 %v239
    %596 = vmatpush.msra.mxu0 %v223
    %597 = vmatpush.msra.mxu0 %v207
    %598 = vmatpush.msra.mxu0 %v191
    %599 = vmatpush.msra.mxu0 %v175
    %600 = vmatpush.msra.mxu0 %v159
    %601 = vmatpush.msra.mxu0 %v143
    %602 = vmatpush.msra.mxu0 %v127
    %603 = vmatpush.msra.mxu0 %v111
    %604 = vmatpush.msra.mxu0 %v95
    %605 = vmatmul.f32.gmra.mxu0 %v307
    %v606 = vpop.f32.mrf.mxu0
    %v607 = vadd.f32 0.0, %v606
    %608 = vdwg.mxu0
    %609 = vmatpush.msra.mxu0 0.0
    %610 = vmatpush.msra.mxu0 0.0
    %611 = vmatpush.msra.mxu0 %v304
    %612 = vmatpush.msra.mxu0 %v288
    %613 = vmatpush.msra.mxu0 %v272
    %614 = vmatpush.msra.mxu0 %v256
    %615 = vmatpush.msra.mxu0 %v240
    %616 = vmatpush.msra.mxu0 %v224
    %617 = vmatpush.msra.mxu0 %v208
    %618 = vmatpush.msra.mxu0 %v192
    %619 = vmatpush.msra.mxu0 %v176
    %620 = vmatpush.msra.mxu0 %v160
    %621 = vmatpush.msra.mxu0 %v144
    %622 = vmatpush.msra.mxu0 %v128
    %623 = vmatpush.msra.mxu0 %v112
    %624 = vmatpush.msra.mxu0 %v96
    %625 = vmatmul.f32.gmra.mxu0 %v307
    %v626 = vpop.f32.mrf.mxu0
    %v627 = vadd.f32 0.0, %v626
    %628 = vdwg.mxu0
    %629 = vst [vmem:[#allocation10] sm:$0xff] %v327
    %630 = vst [vmem:[#allocation10 + $0x8] sm:$0xff] %v347
    %s631 = scalar_lea.vmem [#allocation10], 16
    %632 = vst [vmem:[%s631] sm:$0xff] %v367
    %633 = vst [vmem:[%s631 + $0x8] sm:$0xff] %v387
    %s634 = scalar_lea.vmem [#allocation10], 32
    %635 = vst [vmem:[%s634] sm:$0xff] %v407
    %636 = vst [vmem:[%s634 + $0x8] sm:$0xff] %v427
    %s637 = scalar_lea.vmem [#allocation10], 48
    %638 = vst [vmem:[%s637] sm:$0xff] %v447
    %639 = vst [vmem:[%s637 + $0x8] sm:$0xff] %v467
    %s640 = scalar_lea.vmem [#allocation10], 64
    %641 = vst [vmem:[%s640] sm:$0xff] %v487
    %642 = vst [vmem:[%s640 + $0x8] sm:$0xff] %v507
    %s643 = scalar_lea.vmem [#allocation10], 80
    %644 = vst [vmem:[%s643] sm:$0xff] %v527
    %645 = vst [vmem:[%s643 + $0x8] sm:$0xff] %v547
    %s646 = scalar_lea.vmem [#allocation10], 96
    %647 = vst [vmem:[%s646] sm:$0xff] %v567
    %648 = vst [vmem:[%s646 + $0x8] sm:$0xff] %v587
    %s649 = scalar_lea.vmem [#allocation10], 112
    %650 = vst [vmem:[%s649] sm:$0xff] %v607
    %651 = vst [vmem:[%s649 + $0x8] sm:$0xff] %v627
    %v652 = vld [vmem:[#allocation8] sm:$0xff]
    %v653 = vld [vmem:[#allocation7] sm:$0xff]
    %v654 = vld [vmem:[#allocation7 + $0x8] sm:$0xff]
    %v655 = vld [vmem:[#allocation7 + $0x10] sm:$0xff]
    %v656 = vld [vmem:[#allocation7 + $0x18] sm:$0xff]
    %vm657 = vcmask 130048
    %v659 = vsel %vm657, %v652, 0
    %661 = vmatpush.msra.mxu0 0.0
    %662 = vmatpush.msra.mxu0 0.0
    %663 = vmatpush.msra.mxu0 0.0
    %664 = vmatpush.msra.mxu0 0.0
    %665 = vmatpush.msra.mxu0 0.0
    %666 = vmatpush.msra.mxu0 0.0
    %667 = vmatpush.msra.mxu0 0.0
    %668 = vmatpush.msra.mxu0 0.0
    %669 = vmatpush.msra.mxu0 0.0
    %670 = vmatpush.msra.mxu0 0.0
    %671 = vmatpush.msra.mxu0 0.0
    %672 = vmatpush.msra.mxu0 0.0
    %673 = vmatpush.msra.mxu0 0.0
    %674 = vmatpush.msra.mxu0 0.0
    %675 = vmatpush.msra.mxu0 %v655
    %676 = vmatpush.msra.mxu0 %v653
    %677 = vmatmul.f32.gmra.mxu0 %v659
    %v678 = vpop.f32.mrf.mxu0
    %v679 = vadd.f32 0.0, %v678
    %680 = vdwg.mxu0
    %681 = vmatpush.msra.mxu0 0.0
    %682 = vmatpush.msra.mxu0 0.0
    %683 = vmatpush.msra.mxu0 0.0
    %684 = vmatpush.msra.mxu0 0.0
    %685 = vmatpush.msra.mxu0 0.0
    %686 = vmatpush.msra.mxu0 0.0
    %687 = vmatpush.msra.mxu0 0.0
    %688 = vmatpush.msra.mxu0 0.0
    %689 = vmatpush.msra.mxu0 0.0
    %690 = vmatpush.msra.mxu0 0.0
    %691 = vmatpush.msra.mxu0 0.0
    %692 = vmatpush.msra.mxu0 0.0
    %693 = vmatpush.msra.mxu0 0.0
    %694 = vmatpush.msra.mxu0 0.0
    %695 = vmatpush.msra.mxu0 %v656
    %696 = vmatpush.msra.mxu0 %v654
    %697 = vmatmul.f32.gmra.mxu0 %v659
    %v698 = vpop.f32.mrf.mxu0
    %v699 = vadd.f32 0.0, %v698
    %700 = vdwg.mxu0
    %701 = vst [vmem:[#allocation11] sm:$0xff] %v679
    %s702 = scalar_lea.vmem [#allocation11], 8
    %703 = vst [vmem:[%s702] sm:$0xff] %v699
    // Predicated region
    $region34: #{tpu_custom_call.1} parent=1 // pred_check
      _
    $region35: #{tpu_custom_call.1} parent=1 // pred_check_branch
      %705 = sbr.rel (0) target = $region37
    $region36: #{tpu_custom_call.1} parent=1 // pred_region
      %707 = vsyncadd [#allocation4], 0
      %s708 = sshll.u32 [#allocation10], 4
      %s709 = int_to_ptr.vmem [resolvable:$true] %s708
      %s710 = sshll.u32 %s4, 4
      %s711 = int_to_ptr.hbm [resolvable:$true] %s710
      %716 = dma.vmem_to_hbm [thread:$0]  %s709, 2048, %s711, [#allocation4], 256, 256, 16
    $region37: #{tpu_custom_call.1} parent=1 // pred_fallthru
      _
    // Predicated region
    $region38: #{tpu_custom_call.1} parent=1 // pred_check
      _
    $region39: #{tpu_custom_call.1} parent=1 // pred_check_branch
      %718 = sbr.rel (0) target = $region41
    $region40: #{tpu_custom_call.1} parent=1 // pred_region
      %720 = vsyncadd [#allocation12], 0
      %s721 = sshll.u32 [#allocation11], 4
      %s722 = int_to_ptr.vmem [resolvable:$true] %s721
      %s723 = sshll.u32 %s5, 4
      %s724 = int_to_ptr.hbm [resolvable:$true] %s723
      %729 = dma.vmem_to_hbm [thread:$0]  %s722, 256, %s724, [#allocation12], 128, 128, 8
    $region41: #{tpu_custom_call.1} parent=1 // pred_fallthru
      _
    // Predicated region
    $region42: #{tpu_custom_call.1} parent=1 // pred_check
      _
    $region43: #{tpu_custom_call.1} parent=1 // pred_check_branch
      %731 = sbr.rel (0) target = $region45
    $region44: #{tpu_custom_call.1} parent=1 // pred_region
      %733 = dma.done [#allocation4], 2048
    $region45: #{tpu_custom_call.1} parent=1 // pred_fallthru
      _
    // Predicated region
    $region46: #{tpu_custom_call.1} parent=1 // pred_check
      _
    $region47: #{tpu_custom_call.1} parent=1 // pred_check_branch
      %735 = sbr.rel (0) target = $region49
    $region48: #{tpu_custom_call.1} parent=1 // pred_region
      %737 = dma.done [#allocation12], 256
    $region49: #{tpu_custom_call.1} parent=1 // pred_fallthru
      _
    %738 = vsyncpa [#allocation3], 1
    %739 = vsyncpa [#allocation6], 1
    %740 = vsyncpa [#allocation9], 1
    %741 = vsyncpa [#allocation4], 1
    %742 = vsyncpa [#allocation12], 1

</llo_original>
